<compile_context>
chip_gen: v5e
topology: v5e:2x2
jax: 0.10.0
libtpu: 0.0.40
codegen_flags: <defaults>
</compile_context>

<pallas_src>
from functools import partial

import jax
import jax.numpy as jnp
import numpy as np
from jax.experimental import pallas as pl
from jax.experimental.pallas import tpu as pltpu


# ----------------------------- sizing helpers --------------------------------

def _tpu_vmem_capacity_bytes():
    try:
        return int(pltpu.get_tpu_info().vmem_capacity_bytes)
    except Exception:
        return 64 * 1024 * 1024            # conservative (v7x-sized) fallback


_VMEM_CAP = _tpu_vmem_capacity_bytes()
# Scoped limit: ~3/4 of physical, capped at 96 MiB (=> ~48 MiB v7x, 96 MiB v5e/v6e).
_VMEM_LIMIT = int(min(_VMEM_CAP * 3 // 4, 96 * 1024 * 1024))
# Per-stream block byte budget; mix_x double-buffers 3 streams => ~6x this in flight.
_BLOCK_BUDGET = int(min(4 * 1024 * 1024, _VMEM_LIMIT // 8))


def _sublane_mult(dtype):
    """Sublane multiple for packed layouts: 8 for 4-byte, 16 for bf16, 32 for 1-byte."""
    return max(8, 32 // jnp.dtype(dtype).itemsize)


def _pick_tile(n, limit, mult=8):
    """Largest divisor of n that is <= limit and a multiple of `mult`.
    Falls back to the full extent (always layout-legal: block dim == array dim).
    NOTE: for pathologically factored huge n the fallback can exceed the block
    budget; acceptable here since all tested/typical shapes factor cleanly."""
    limit = max(1, int(limit))
    if n <= limit:
        return n
    top = (limit // mult) * mult
    for d in range(top, 0, -mult):
        if n % d == 0:
            return d
    return n


def _flatten_rows(inner_elems):
    """Pick a lane-dense (rows, lanes) factorization of a flattened row."""
    if inner_elems % 128 == 0:
        return inner_elems // 128, 128
    return None


# ----------------------------- kernels ---------------------------------------

def _smooth_onehot_kernel(y_ref, my_ref, *, true_class, false_class):
    # y_ref: (TB, 1) int32, my_ref: (TB, C)
    cls = jax.lax.broadcasted_iota(jnp.int32, my_ref.shape, 1)
    my_ref[...] = jnp.where(cls == y_ref[...],
                            true_class + false_class,
                            false_class).astype(my_ref.dtype)


def _mix_x_kernel(perm_ref, lam_ref, x_ref, xp_ref, o_ref, *, batch_axis):
    # perm_ref is only consumed by the index_maps (permuted-row DMA).
    del perm_ref
    lam = lam_ref[pl.program_id(batch_axis)]          # scalar f32 from SMEM
    o_ref[...] = (x_ref[...].astype(jnp.float32) * (1.0 - lam)
                  + xp_ref[...].astype(jnp.float32) * lam).astype(o_ref.dtype)


def _mix_y_kernel(lam_ref, my_ref, myp_ref, o_ref):
    # grid = (label_chunk j  [outer], batch i [inner]); my/myp blocks depend only
    # on j, so they stay VMEM-resident across the whole inner i loop.
    lam = lam_ref[pl.program_id(1)]                   # scalar f32 from SMEM
    o_ref[...] = (my_ref[...] * (1.0 - lam)
                  + myp_ref[...] * lam).astype(o_ref.dtype)


# ----------------------------- wrappers ---------------------------------------

def smooth_onehot(y, num_classes, smooth_eps, dtype):
    # num_classes == 1 would divide by zero (same as the PyTorch reference).
    B = y.shape[0]
    C = num_classes
    tc = 1.0 - smooth_eps * num_classes / (num_classes - 1)
    fc = smooth_eps / (num_classes - 1)
    itemsize = jnp.dtype(dtype).itemsize
    mult = _sublane_mult(dtype)
    tb = _pick_tile(B, max(mult, _BLOCK_BUDGET // max(1, C * itemsize)), mult)
    kernel = partial(_smooth_onehot_kernel, true_class=float(tc),
                     false_class=float(fc))
    return pl.pallas_call(
        kernel,
        out_shape=jax.ShapeDtypeStruct((B, C), dtype),
        grid=(B // tb,),
        in_specs=[pl.BlockSpec((tb, 1), lambda b: (b, 0))],
        out_specs=pl.BlockSpec((tb, C), lambda b: (b, 0)),
        compiler_params=pltpu.CompilerParams(
            dimension_semantics=("parallel",),
            vmem_limit_bytes=_VMEM_LIMIT),
    )(y.astype(jnp.int32).reshape(B, 1))


def mix_x(x, perm, lam):
    """o[b] = x[b]*(1-lam[b]) + x[perm[b]]*lam[b], permuted rows DMA'd directly
    via a scalar-prefetched perm in the index_map.  Rows are flattened to a
    lane-dense (rows, 128) layout when S*D divides 128."""
    B, S, D = x.shape
    flat = _flatten_rows(S * D)
    if flat is not None:
        R, L = flat                       # lane-dense: last dim exactly 128
    else:
        R, L = S, D                       # fallback: full-D lanes (layout-legal)
    x3 = x.reshape(B, R, L)
    itemsize = jnp.dtype(x.dtype).itemsize
    mult = _sublane_mult(x.dtype)
    tr = _pick_tile(R, max(mult, _BLOCK_BUDGET // max(1, L * itemsize)), mult)
    nr = R // tr

    # Put the larger parallel extent first so v7x's two TensorCores stay fed.
    batch_major = B >= nr
    if batch_major:
        grid = (B, nr)
        x_map = lambda b, r, perm_ref: (b, r, 0)
        xp_map = lambda b, r, perm_ref: (perm_ref[b], r, 0)
        batch_axis = 0
    else:
        grid = (nr, B)
        x_map = lambda r, b, perm_ref: (b, r, 0)
        xp_map = lambda r, b, perm_ref: (perm_ref[b], r, 0)
        batch_axis = 1

    kernel = partial(_mix_x_kernel, batch_axis=batch_axis)
    # TODO(synk): when S*D*itemsize is tiny (<~256 KiB), batch several rows per
    # grid step with a manual make_async_copy gather of the permuted rows; also
    # worth sweeping pipeline_mode=pl.Buffered(3) on the permuted-x stream.
    out = pl.pallas_call(
        kernel,
        out_shape=jax.ShapeDtypeStruct((B, R, L), x.dtype),
        grid_spec=pltpu.PrefetchScalarGridSpec(
            num_scalar_prefetch=1,               # perm -> SMEM, seen by index_maps
            grid=grid,
            in_specs=[
                pl.BlockSpec(memory_space=pltpu.MemorySpace.SMEM),   # lam (B,)
                pl.BlockSpec((None, tr, L), x_map),
                pl.BlockSpec((None, tr, L), xp_map),                 # permuted x
            ],
            out_specs=pl.BlockSpec((None, tr, L), x_map),
        ),
        compiler_params=pltpu.CompilerParams(
            dimension_semantics=("parallel", "parallel"),
            vmem_limit_bytes=_VMEM_LIMIT),
    )(perm, lam, x3, x3)
    return out.reshape(B, S, D)


def mix_y(my_f32, perm, lam, out_dtype):
    """(B, B, C) mixed labels: o[i, j, c] = my[j, c]*(1-lam[i]) + my[perm[j], c]*lam[i].
    The smoothed one-hot (f32) is streamed in lane-dense blocks; the label-chunk
    axis is OUTER so each my/my[perm] block is fetched once and reused across i."""
    B, C = my_f32.shape
    myp_f32 = my_f32[perm]                # tiny (B, C) gather, negligible
    flat = _flatten_rows(B * C)
    if flat is not None:
        R, L = flat                       # lane-dense: last dim exactly 128
    else:
        R, L = B, C                       # fallback: full-C lanes (layout-legal)
    my2 = my_f32.reshape(R, L)
    myp2 = myp_f32.reshape(R, L)
    mult = max(8, _sublane_mult(out_dtype))
    tr = _pick_tile(R, max(mult, _BLOCK_BUDGET // max(1, L * 4)), mult)
    nr = R // tr

    grid = (nr, B)                        # j outer (resident my blocks), i inner
    out = pl.pallas_call(
        _mix_y_kernel,
        out_shape=jax.ShapeDtypeStruct((B, R, L), out_dtype),
        grid=grid,
        in_specs=[
            pl.BlockSpec(memory_space=pltpu.MemorySpace.SMEM),    # lam (B,)
            pl.BlockSpec((tr, L), lambda j, i: (j, 0)),           # my (reused over i)
            pl.BlockSpec((tr, L), lambda j, i: (j, 0)),           # my[perm]
        ],
        out_specs=pl.BlockSpec((None, tr, L), lambda j, i: (i, j, 0)),
        compiler_params=pltpu.CompilerParams(
            dimension_semantics=("parallel", "parallel"),
            vmem_limit_bytes=_VMEM_LIMIT),
    )(lam, my2, myp2)
    return out.reshape(B, B, C)


def mixup_pallas(x, y, num_classes, gamma, smooth_eps, perm, lam):
    """Functional mixup.  `perm` (B,) and `lam` (B,1,1)/(B,) are the random
    draws (sampled outside so the Pallas path is deterministic / testable)."""
    if gamma == 0 and smooth_eps == 0:
        return x, y
    if gamma == 0:
        return x, smooth_onehot(y, num_classes, smooth_eps, x.dtype)
    perm = perm.astype(jnp.int32)
    lam_flat = lam.reshape(-1).astype(jnp.float32)     # keep lam math in f32
    my = smooth_onehot(y, num_classes, smooth_eps, jnp.float32)
    xm = mix_x(x, perm, lam_flat)
    ym = mix_y(my, perm, lam_flat, x.dtype)
    return xm, ym


class Mixup:
    """JAX/Pallas counterpart of the PyTorch Mixup module."""

    def __init__(self, num_classes=1000, gamma=0, smooth_eps=0):
        self.num_classes = num_classes
        self.gamma = gamma
        self.smooth_eps = smooth_eps

    def __call__(self, x, y, key):
        B = x.shape[0]
        k_perm, k_beta = jax.random.split(key)
        # TODO(synk): randperm + Beta sampling have no Pallas primitive; done
        # with jax.random host-side glue (not the hot path).
        perm = jax.random.permutation(k_perm, B)
        a = self.gamma if self.gamma else 1.0
        lam = jax.random.beta(k_beta, a, a, shape=(B,))
        return mixup_pallas(x, y, self.num_classes, self.gamma,
                            self.smooth_eps, perm, lam)


# ----------------------------- reference (plain JAX) --------------------------

def mixup_ref(x, y, num_classes, gamma, smooth_eps, perm, lam):
    if gamma == 0 and smooth_eps == 0:
        return x, y
    my = jax.nn.one_hot(y, num_classes, dtype=jnp.float32)
    tc = 1.0 - smooth_eps * num_classes / (num_classes - 1)
    fc = smooth_eps / (num_classes - 1)
    my = my * tc + fc
    if gamma == 0:
        return x, my.astype(x.dtype)
    lam = lam.reshape(-1, 1, 1).astype(jnp.float32)
    x2, y2 = x[perm], my[perm]
    xm = (x.astype(jnp.float32) * (1.0 - lam)
          + x2.astype(jnp.float32) * lam).astype(x.dtype)
    ym = (my[None, :, :] * (1.0 - lam) + y2[None, :, :] * lam).astype(x.dtype)
    return xm, ym


# ----------------------------- main --------------------------------------------

if __name__ == "__main__":
    def _check(B, S, D, num_classes, gamma, smooth_eps, seed):
        key = jax.random.PRNGKey(seed)
        kx, ky, kperm, kbeta = jax.random.split(key, 4)
        x = jax.random.normal(kx, (B, S, D), dtype=jnp.float32)
        y = jax.random.randint(ky, (B,), 0, num_classes, dtype=jnp.int32)
        perm = jax.random.permutation(kperm, B)
        a = gamma if gamma else 1.0
        lam = jax.random.beta(kbeta, a, a, shape=(B, 1, 1))
        out = mixup_pallas(x, y, num_classes, gamma, smooth_eps, perm, lam)
        jax.block_until_ready(out)
        ref = mixup_ref(x, y, num_classes, gamma, smooth_eps, perm, lam)
        for o, r in zip(out, ref):
            np.testing.assert_allclose(np.asarray(o), np.asarray(r),
                                       rtol=1e-5, atol=1e-5)

    # Lane-dense path: S*D = 256 and B*C = 128 are multiples of 128.
    _check(B=8, S=8, D=32, num_classes=16, gamma=1.0, smooth_eps=0.1, seed=0)
    # Label-smoothing-only path (gamma == 0).
    _check(B=8, S=8, D=32, num_classes=16, gamma=0, smooth_eps=0.1, seed=1)
    # Fallback (non-128-divisible) blocking path.
    _check(B=8, S=5, D=24, num_classes=10, gamma=1.0, smooth_eps=0.05, seed=2)

    print("KERNEL_OK")
</pallas_src>

<mosaic_0001>
module attributes {stable_mosaic.version = 11 : i64} {
  func.func @_smooth_onehot_kernel(%arg0: i32, %arg1: memref<8x1xi32, #tpu.memory_space<vmem>>, %arg2: memref<8x16xf32, #tpu.memory_space<vmem>>) attributes {dimension_semantics = [#tpu.dimension_semantics<parallel>], iteration_bounds = array<i64: 1>, scalar_prefetch = 0 : i64, scratch_operands = 0 : i64, tpu.core_type = #tpu.core_type<tc>, window_params = [{transform_indices = @transform_0, window_bounds = array<i64: 8, 1>}, {transform_indices = @transform_1, window_bounds = array<i64: 8, 16>}]} {
    %0 = tpu.iota {dimensions = array<i32: 1>} : vector<8x16xi32>
    %c0 = arith.constant 0 : index
    %c0_0 = arith.constant 0 : index
    %1 = vector.load %arg1[%c0, %c0_0] : memref<8x1xi32, #tpu.memory_space<vmem>>, vector<8x1xi32>
    %2 = vector.broadcast %1 : vector<8x1xi32> to vector<8x16xi32>
    %3 = arith.cmpi eq, %0, %2 : vector<8x16xi32>
    %cst = arith.constant 0.899999976 : f32
    %cst_1 = arith.constant 0.00666666683 : f32
    %4 = vector.broadcast %cst : f32 to vector<8x16xf32>
    %5 = vector.broadcast %cst_1 : f32 to vector<8x16xf32>
    %6 = arith.select %3, %4, %5 : vector<8x16xi1>, vector<8x16xf32>
    %c0_2 = arith.constant 0 : index
    %c0_3 = arith.constant 0 : index
    %7 = vector.load %arg2[%c0_2, %c0_3] : memref<8x16xf32, #tpu.memory_space<vmem>>, vector<8x16xf32>
    tpu.vector_store %arg2[%c0_2, %c0_3], %6 {strides = array<i32>} : memref<8x16xf32, #tpu.memory_space<vmem>>, vector<8x16xf32>,
    return
  }
  func.func @transform_0(%arg0: i32) -> (i32, i32) {
    %c0_i32 = arith.constant 0 : i32
    %c0_i32_0 = arith.constant 0 : i32
    return %arg0, %c0_i32 : i32, i32
  }
  func.func @transform_1(%arg0: i32) -> (i32, i32) {
    %c0_i32 = arith.constant 0 : i32
    %c0_i32_0 = arith.constant 0 : i32
    return %arg0, %c0_i32 : i32, i32
  }
}

</mosaic_0001>

<llo_original>
// kernel: tpu_custom_call.1
$region0: #{tpu_custom_call.1}
  #allocation0 [shape = 'u32[]', space=smem, size = 0x4, offset = 0x4, fixed_abs, tag = 'smem constant byte address 0x4 - core index']
  #allocation1 [shape = 'u32[72,128]{1,0:T(1,128)}', space=vmem, size = 0x9000, scoped, tag = 'internal scratch']
  %s0 = inlined_call_operand.vmem [shape: s32[8,1], index: 0, kind: input, shape index: {}]
  %s1 = inlined_call_operand.hbm [shape: f32[8,16], index: 1, kind: output, shape index: {}]
  %s2 = sld [smem:[#allocation0]]
  $region14: #{tpu_custom_call.1} parent=0
    _
  %s4 = ssub.s32 1, %s2
  %s5 = scalar_select 0, %s4, %s2
  $region1: #{tpu_custom_call.1} parent=0
    #allocation2 [shape = 'u8[4096]{0}', space=vmem, size = 0x1000, scoped, tag = 'output window, operand 0, single buffered']
    #allocation3 [shape = 's32[1]{0}', space=sflag, size = 0x4, scoped, tag = 'scoped memory for tpu_custom_call.1']
    %6 = vsyncpa [#allocation3], 0
    // Predicated region
    $region2: #{tpu_custom_call.1} parent=1 // pred_check
      _
    $region3: #{tpu_custom_call.1} parent=1 // pred_check_branch
      %8 = sbr.rel (0) target = $region5
    $region4: #{tpu_custom_call.1} parent=1 // pred_region
      _
    $region5: #{tpu_custom_call.1} parent=1 // pred_fallthru
      _
    %v9 = vlaneseq
    %v10 = vand.u32 %v9, 127
    %v11 = vld [vmem:[%s0] sm:$0xff]
    %12 = vset.pattern.permute.xlu0 0
    %13 = vperm.xlu0 %12, %v11
    %v14 = vpop.permute.xlu0 %13
    %vm15 = vcmp.eq.s32.totalorder %v10, %v14
    %v16 = vsel %vm15, 0.9, 0.006666667
    %vm17 = vcmask 130048
    %18 = vst.msk [vmem:[#allocation2] sm:$0xff] %vm17, %v16
    // Predicated region
    $region6: #{tpu_custom_call.1} parent=1 // pred_check
      _
    $region7: #{tpu_custom_call.1} parent=1 // pred_check_branch
      %20 = sbr.rel (0) target = $region9
    $region8: #{tpu_custom_call.1} parent=1 // pred_region
      %22 = vsyncadd [#allocation3], 0
      %s24 = sshll.u32 [#allocation2], 4
      %s25 = int_to_ptr.vmem [resolvable:$true] %s24
      %s26 = sshll.u32 %s1, 4
      %s27 = int_to_ptr.hbm [resolvable:$true] %s26
      %29 = dma.vmem_to_hbm [thread:$0]  %s25, 128, %s27, [#allocation3]
    $region9: #{tpu_custom_call.1} parent=1 // pred_fallthru
      _
    // Predicated region
    $region10: #{tpu_custom_call.1} parent=1 // pred_check
      _
    $region11: #{tpu_custom_call.1} parent=1 // pred_check_branch
      %31 = sbr.rel (0) target = $region13
    $region12: #{tpu_custom_call.1} parent=1 // pred_region
      %33 = dma.done [#allocation3], 128
    $region13: #{tpu_custom_call.1} parent=1 // pred_fallthru
      _
    %34 = vsyncpa [#allocation3], 1

</llo_original>
